<compile_context>
chip_gen: v5e
topology: v5e:2x2
jax: 0.10.0
libtpu: 0.0.40
codegen_flags: <defaults>
</compile_context>

<pallas_src>
import functools

import jax
import jax.numpy as jnp
import numpy as np
from jax.experimental import pallas as pl
from jax.experimental.pallas import tpu as pltpu


# ----------------------------------------------------------------------------
# Kernel: one row tile of  out = x @ w + b
# ----------------------------------------------------------------------------
def _gemm_bias_kernel(x_ref, w_ref, b_ref, o_ref):
    """x:(tr,Kc)  w:(Kc,Nc)  b:(1,Nc)  o:(tr,Nc)."""
    tr, kc = x_ref.shape
    nc = o_ref.shape[-1]
    x = x_ref[...]
    w = w_ref[...]
    if kc <= 8 and tr * nc <= 160 * 192:
        # Tiny contraction AND the accumulator fits comfortably in vregs
        # (default YaTC shape: tr=160, Nc=192): K broadcast mul-adds on the
        # VPU; the MXU would be >95% idle and adds push/drain latency.
        acc = b_ref[...].astype(jnp.float32)                     # (1, Nc)
        for t in range(kc):                                      # static unroll
            acc = acc + (x[:, t:t + 1].astype(jnp.float32)
                         * w[t:t + 1, :].astype(jnp.float32))    # (tr, Nc)
        o_ref[...] = acc.astype(o_ref.dtype)
    else:
        # MXU path for all large tiles (and on v5e): no long-lived VPU
        # accumulator, result streams from the matmul unit to the store.
        acc = jnp.dot(x, w, preferred_element_type=jnp.float32)
        o_ref[...] = (acc + b_ref[...].astype(jnp.float32)).astype(o_ref.dtype)


# ----------------------------------------------------------------------------
# Tiling logic
# ----------------------------------------------------------------------------
def _pad_up(v, m):
    return ((v + m - 1) // m) * m


def _rows_per_step(R, Kc, Nc, itemsize=4,
                   single_step_bytes=512 * 1024,
                   vmem_budget_bytes=24 * 1024 * 1024):
    """Rows of X / out per grid step.

    * total I/O <= 512 KiB -> one step (per-step overhead ~0.35us dominates).
    * otherwise: >= 4 grid steps (pipelining + >=2 "parallel" steps so both
      v7x TensorCores get work), rows capped by a double-buffered VMEM budget
      (lane/sublane padding included; ~24 MiB is safe under v7x's 32 MiB
      scoped default and leaves huge margin on v5e/v6e).  grid = cdiv(R, tr);
      Pallas pads the last block, so no divisor search.
    """
    total_io = (R * Kc + Kc * Nc + Nc + R * Nc) * itemsize
    if total_io <= single_step_bytes:
        return R
    kc_pad, nc_pad = _pad_up(Kc, 128), _pad_up(Nc, 128)
    fixed = 2 * (_pad_up(Kc, 8) * nc_pad + nc_pad) * itemsize   # weight + bias
    per_row = 2 * (kc_pad + nc_pad) * itemsize                  # x + out tiles
    tr_vmem = max(8, (vmem_budget_bytes - fixed) // per_row)
    tr_overlap = pl.cdiv(R, 4)                                  # >= 4 steps
    tr = max(8, (min(int(tr_vmem), int(tr_overlap)) // 8) * 8)
    return tr


def _rowblock_gemm(x2d, w2d, b_row):
    """Row-tiled  out = x2d @ w2d + b_row  as a single pallas_call."""
    R, Kc = x2d.shape
    Nc = w2d.shape[1]
    tr = _rows_per_step(R, Kc, Nc)
    grid = (pl.cdiv(R, tr),)

    cost = pl.CostEstimate(
        flops=2 * R * Kc * Nc,
        transcendentals=0,
        bytes_accessed=4 * (R * Kc + Kc * Nc + Nc + R * Nc),
    )

    return pl.pallas_call(
        _gemm_bias_kernel,
        out_shape=jax.ShapeDtypeStruct((R, Nc), jnp.float32),
        grid_spec=pltpu.PrefetchScalarGridSpec(
            num_scalar_prefetch=0,
            grid=grid,
            in_specs=[
                pl.BlockSpec((tr, Kc), lambda i: (i, 0)),
                pl.BlockSpec((Kc, Nc), lambda i: (0, 0)),
                pl.BlockSpec((1, Nc), lambda i: (0, 0)),
            ],
            out_specs=pl.BlockSpec((tr, Nc), lambda i: (i, 0)),
        ),
        compiler_params=pltpu.CompilerParams(
            dimension_semantics=("parallel",),
            # Allow XLA to fuse the cheap producer of x2d (bitcast reshape /
            # small patchify) into the pallas_call operand instead of
            # materializing it in HBM.
            allow_input_fusion=[True, False, False],
            vmem_limit_bytes=32 * 1024 * 1024,
        ),
        cost_estimate=cost,
    )(x2d, w2d, b_row)


# ----------------------------------------------------------------------------
# Wrapper paths
# ----------------------------------------------------------------------------
def _forward_im2col(x, weight, bias, ph, pw):
    """Small-N path: explicit (M, K) patches @ (K, E)."""
    N, C, H, W = x.shape
    E = weight.shape[0]
    gh, gw = H // ph, W // pw
    M, K = N * gh * gw, C * ph * pw

    # (c, kh, kw) flattening order matches the OIHW weight reshape below.
    xp = x.reshape(N, C, gh, ph, gw, pw)
    xp = jnp.transpose(xp, (0, 2, 4, 1, 3, 5))          # (N, gh, gw, C, ph, pw)
    patches = xp.reshape(M, K)

    w2d = jnp.transpose(weight.reshape(E, K), (1, 0))   # (K, E)
    out2d = _rowblock_gemm(patches, w2d, bias.reshape(1, E))
    return out2d.reshape(N, gh * gw, E)


def _forward_folded(x, weight, bias, ph, pw):
    """Large-N path: no patches array, MXU absorbs the patchify, lane-dense out.

    X = x reshaped to (N*gh, C*ph*W) -- a pure bitcast for C == 1.
    Wfold[(c,kh,w_idx), (gwi,e)] = W[e,c,kh, w_idx - gwi*pw] on the block
    diagonal (w_idx // pw == gwi), zero elsewhere, so one GEMM performs both
    patch extraction and projection and writes the output directly in the
    row-major-equivalent (N*gh, gw*E) layout.  Costs ~2*(C*ph*W)*(gw*E)*4
    bytes of extra weight build+read per call, amortized over large N.
    """
    N, C, H, W = x.shape
    E = weight.shape[0]
    gh, gw = H // ph, W // pw
    Kc, Nc = C * ph * W, gw * E

    if C == 1:
        x2d = x.reshape(N * gh, Kc)                      # bitcast, no HBM copy
    else:
        # TODO(synk): for C > 1 this transpose materializes one copy of x
        # (still tiny vs. the output); YaTC uses in_chans == 1.
        x2d = jnp.transpose(x.reshape(N, C, gh, ph * W),
                            (0, 2, 1, 3)).reshape(N * gh, Kc)

    wT = jnp.transpose(weight, (1, 2, 3, 0))             # (C, ph, pw, E)
    eye = jnp.eye(gw, dtype=weight.dtype)                # block-diagonal selector
    wfold = jnp.einsum("cpke,gh->cpgkhe", wT, eye).reshape(Kc, Nc)
    bfold = jnp.tile(bias, gw).reshape(1, Nc)

    out2d = _rowblock_gemm(x2d, wfold, bfold)            # (N*gh, gw*E)
    return out2d.reshape(N, gh * gw, E)                  # metadata-only reshape


def patch_embed_forward(x, weight, bias, patch_size=(2, 2), folded=None):
    """x: [N,C,H,W], weight: [E,C,ph,pw] (OIHW), bias: [E] -> [N, num_patches, E].

    Matches Conv2d(C,E,kernel_size=patch_size,stride=patch_size)(x)
            .flatten(2).transpose(1,2).
    folded=None picks the formulation automatically; True/False force it.
    """
    ph, pw = patch_size
    N, C, H, W = x.shape
    gh, gw = H // ph, W // pw
    E = weight.shape[0]
    if folded is None:
        # Use the folded path once its fixed extra weight traffic
        # (~2*Kc*Nc*4 bytes) is <= ~25% of the unavoidable per-row traffic.
        extra = 2 * (C * ph * W) * (gw * E)
        base = N * gh * (C * ph * W + gw * E)
        folded = 4 * extra <= base
    if folded:
        return _forward_folded(x, weight, bias, ph, pw)
    return _forward_im2col(x, weight, bias, ph, pw)


# ----------------------------------------------------------------------------
# Self-test
# ----------------------------------------------------------------------------
if __name__ == "__main__":
    ph, pw = 2, 2
    E = 192

    def reference(x, weight, bias):
        r = jax.lax.conv_general_dilated(
            x, weight, window_strides=(ph, pw), padding="VALID",
            dimension_numbers=("NCHW", "OIHW", "NCHW"))
        r = r + bias.reshape(1, E, 1, 1)
        return r.reshape(r.shape[0], E, -1).transpose(0, 2, 1)

    key = jax.random.PRNGKey(0)
    kx, kw_, kb = jax.random.split(key, 3)
    weight = jax.random.normal(kw_, (E, 1, ph, pw), dtype=jnp.float32) * 0.02
    bias = jax.random.normal(kb, (E,), dtype=jnp.float32) * 0.02

    # (1) Module-default shape: img_size=40 -> spatial (8, 40), in_chans=1.
    #     Auto-selects the im2col path, single grid step, VPU branch.
    x_small = jax.random.normal(kx, (2, 1, 8, 40), dtype=jnp.float32)
    fwd = jax.jit(functools.partial(patch_embed_forward, patch_size=(ph, pw)))
    out = jax.block_until_ready(fwd(x_small, weight, bias))
    assert out.shape == (2, 80, E), out.shape
    np.testing.assert_allclose(np.asarray(out),
                               np.asarray(reference(x_small, weight, bias)),
                               rtol=1e-5, atol=1e-5)

    # (2) Larger batch, im2col path forced: exercises cdiv multi-step tiling
    #     and the MXU kernel branch.  (Tolerance allows MXU f32 default
    #     precision.)
    x_big = jax.random.normal(kx, (64, 1, 8, 40), dtype=jnp.float32)
    fwd_i = jax.jit(functools.partial(patch_embed_forward,
                                      patch_size=(ph, pw), folded=False))
    out = jax.block_until_ready(fwd_i(x_big, weight, bias))
    ref_big = np.asarray(reference(x_big, weight, bias))
    np.testing.assert_allclose(np.asarray(out), ref_big, rtol=3e-3, atol=3e-3)

    # (3) Same batch, folded (no-patches, lane-dense) path forced: exercises
    #     the large-N formulation with multi-step tiling.
    fwd_f = jax.jit(functools.partial(patch_embed_forward,
                                      patch_size=(ph, pw), folded=True))
    out = jax.block_until_ready(fwd_f(x_big, weight, bias))
    np.testing.assert_allclose(np.asarray(out), ref_big, rtol=3e-3, atol=3e-3)

    print("KERNEL_OK")
</pallas_src>

<mosaic_0001>
module attributes {stable_mosaic.version = 11 : i64} {
  func.func @_gemm_bias_kernel(%arg0: i32, %arg1: memref<160x4xf32, #tpu.memory_space<vmem>>, %arg2: memref<4x192xf32, #tpu.memory_space<vmem>>, %arg3: memref<1x192xf32, #tpu.memory_space<vmem>>, %arg4: memref<160x192xf32, #tpu.memory_space<vmem>>) attributes {dimension_semantics = [#tpu.dimension_semantics<parallel>], iteration_bounds = array<i64: 1>, scalar_prefetch = 0 : i64, scratch_operands = 0 : i64, tpu.core_type = #tpu.core_type<tc>, window_params = [{transform_indices = @transform_0, window_bounds = array<i64: 160, 4>}, {pipeline_mode = #tpu.pipeline_mode<synchronous>, transform_indices = @transform_1, window_bounds = array<i64: 4, 192>}, {pipeline_mode = #tpu.pipeline_mode<synchronous>, transform_indices = @transform_2, window_bounds = array<i64: 1, 192>}, {transform_indices = @transform_3, window_bounds = array<i64: 160, 192>}]} {
    %c0 = arith.constant 0 : index
    %c0_0 = arith.constant 0 : index
    %0 = vector.load %arg1[%c0, %c0_0] : memref<160x4xf32, #tpu.memory_space<vmem>>, vector<160x4xf32>
    %c0_1 = arith.constant 0 : index
    %c0_2 = arith.constant 0 : index
    %1 = vector.load %arg2[%c0_1, %c0_2] : memref<4x192xf32, #tpu.memory_space<vmem>>, vector<4x192xf32>
    %c0_3 = arith.constant 0 : index
    %c0_4 = arith.constant 0 : index
    %2 = vector.load %arg3[%c0_3, %c0_4] : memref<1x192xf32, #tpu.memory_space<vmem>>, vector<1x192xf32>
    %3 = vector.extract_strided_slice %0 {offsets = [0, 0], sizes = [160, 1], strides = [1, 1]} : vector<160x4xf32> to vector<160x1xf32>
    %4 = vector.extract_strided_slice %1 {offsets = [0, 0], sizes = [1, 192], strides = [1, 1]} : vector<4x192xf32> to vector<1x192xf32>
    %5 = vector.broadcast %3 : vector<160x1xf32> to vector<160x192xf32>
    %6 = vector.broadcast %4 : vector<1x192xf32> to vector<160x192xf32>
    %7 = arith.mulf %5, %6 : vector<160x192xf32>
    %8 = vector.broadcast %2 : vector<1x192xf32> to vector<160x192xf32>
    %9 = arith.addf %8, %7 : vector<160x192xf32>
    %10 = vector.extract_strided_slice %0 {offsets = [0, 1], sizes = [160, 1], strides = [1, 1]} : vector<160x4xf32> to vector<160x1xf32>
    %11 = vector.extract_strided_slice %1 {offsets = [1, 0], sizes = [1, 192], strides = [1, 1]} : vector<4x192xf32> to vector<1x192xf32>
    %12 = vector.broadcast %10 : vector<160x1xf32> to vector<160x192xf32>
    %13 = vector.broadcast %11 : vector<1x192xf32> to vector<160x192xf32>
    %14 = arith.mulf %12, %13 : vector<160x192xf32>
    %15 = arith.addf %9, %14 : vector<160x192xf32>
    %16 = vector.extract_strided_slice %0 {offsets = [0, 2], sizes = [160, 1], strides = [1, 1]} : vector<160x4xf32> to vector<160x1xf32>
    %17 = vector.extract_strided_slice %1 {offsets = [2, 0], sizes = [1, 192], strides = [1, 1]} : vector<4x192xf32> to vector<1x192xf32>
    %18 = vector.broadcast %16 : vector<160x1xf32> to vector<160x192xf32>
    %19 = vector.broadcast %17 : vector<1x192xf32> to vector<160x192xf32>
    %20 = arith.mulf %18, %19 : vector<160x192xf32>
    %21 = arith.addf %15, %20 : vector<160x192xf32>
    %22 = vector.extract_strided_slice %0 {offsets = [0, 3], sizes = [160, 1], strides = [1, 1]} : vector<160x4xf32> to vector<160x1xf32>
    %23 = vector.extract_strided_slice %1 {offsets = [3, 0], sizes = [1, 192], strides = [1, 1]} : vector<4x192xf32> to vector<1x192xf32>
    %24 = vector.broadcast %22 : vector<160x1xf32> to vector<160x192xf32>
    %25 = vector.broadcast %23 : vector<1x192xf32> to vector<160x192xf32>
    %26 = arith.mulf %24, %25 : vector<160x192xf32>
    %27 = arith.addf %21, %26 : vector<160x192xf32>
    %c0_5 = arith.constant 0 : index
    %c0_6 = arith.constant 0 : index
    %28 = vector.load %arg4[%c0_5, %c0_6] : memref<160x192xf32, #tpu.memory_space<vmem>>, vector<160x192xf32>
    tpu.vector_store %arg4[%c0_5, %c0_6], %27 {strides = array<i32>} : memref<160x192xf32, #tpu.memory_space<vmem>>, vector<160x192xf32>,
    return
  }
  func.func @transform_0(%arg0: i32) -> (i32, i32) {
    %c0_i32 = arith.constant 0 : i32
    %c0_i32_0 = arith.constant 0 : i32
    return %arg0, %c0_i32 : i32, i32
  }
  func.func @transform_1(%arg0: i32) -> (i32, i32) {
    %c0_i32 = arith.constant 0 : i32
    %c0_i32_0 = arith.constant 0 : i32
    %c0_i32_1 = arith.constant 0 : i32
    return %c0_i32, %c0_i32_0 : i32, i32
  }
  func.func @transform_2(%arg0: i32) -> (i32, i32) {
    %c0_i32 = arith.constant 0 : i32
    %c0_i32_0 = arith.constant 0 : i32
    %c0_i32_1 = arith.constant 0 : i32
    return %c0_i32, %c0_i32_0 : i32, i32
  }
  func.func @transform_3(%arg0: i32) -> (i32, i32) {
    %c0_i32 = arith.constant 0 : i32
    %c0_i32_0 = arith.constant 0 : i32
    return %arg0, %c0_i32 : i32, i32
  }
}

</mosaic_0001>

<llo_original>
// kernel: patch_embed_forward.1
$region0: #{patch_embed_forward.1}
  #allocation0 [shape = 'u32[]', space=smem, size = 0x4, offset = 0x4, fixed_abs, tag = 'smem constant byte address 0x4 - core index']
  #allocation1 [shape = 'u32[72,128]{1,0:T(1,128)}', space=vmem, size = 0x9000, scoped, tag = 'internal scratch']
  %s0 = inlined_call_operand.vmem [shape: f32[160,4], index: 0, kind: input, shape index: {}]
  %s1 = inlined_call_operand.vmem [shape: f32[4,192], index: 1, kind: input, shape index: {}]
  %s2 = inlined_call_operand.vmem [shape: f32[1,192], index: 2, kind: input, shape index: {}]
  %s3 = inlined_call_operand.hbm [shape: f32[160,192], index: 3, kind: output, shape index: {}]
  %s4 = sld [smem:[#allocation0]]
  $region22: #{patch_embed_forward.1} parent=0
    _
  %s6 = ssub.s32 1, %s4
  %s7 = scalar_select 0, %s6, %s4
  $region1: #{patch_embed_forward.1} parent=0
    #allocation2 [shape = 'u8[163840]{0}', space=vmem, size = 0x28000, scoped, tag = 'output window, operand 0, single buffered']
    #allocation3 [shape = 's32[1]{0}', space=sflag, size = 0x4, scoped, tag = 'scoped memory for patch_embed_forward.1']
    %8 = vsyncpa [#allocation3], 0
    // Predicated region
    $region2: #{patch_embed_forward.1} parent=1 // pred_check
      _
    $region3: #{patch_embed_forward.1} parent=1 // pred_check_branch
      %10 = sbr.rel (0) target = $region5
    $region4: #{patch_embed_forward.1} parent=1 // pred_region
      _
    $region5: #{patch_embed_forward.1} parent=1 // pred_fallthru
      _
    // Predicated region
    $region6: #{patch_embed_forward.1} parent=1 // pred_check
      _
    $region7: #{patch_embed_forward.1} parent=1 // pred_check_branch
      %12 = sbr.rel (0) target = $region9
    $region8: #{patch_embed_forward.1} parent=1 // pred_region
      _
    $region9: #{patch_embed_forward.1} parent=1 // pred_fallthru
      _
    // Predicated region
    $region10: #{patch_embed_forward.1} parent=1 // pred_check
      _
    $region11: #{patch_embed_forward.1} parent=1 // pred_check_branch
      %14 = sbr.rel (0) target = $region13
    $region12: #{patch_embed_forward.1} parent=1 // pred_region
      _
    $region13: #{patch_embed_forward.1} parent=1 // pred_fallthru
      _
    %v15 = vld [vmem:[%s0] sm:$0xff]
    %v16 = vld [vmem:[%s0 + $0x8] sm:$0xff]
    %v17 = vld [vmem:[%s0 + $0x10] sm:$0xff]
    %v18 = vld [vmem:[%s0 + $0x18] sm:$0xff]
    %v19 = vld [vmem:[%s0 + $0x20] sm:$0xff]
    %v20 = vld [vmem:[%s0 + $0x28] sm:$0xff]
    %v21 = vld [vmem:[%s0 + $0x30] sm:$0xff]
    %v22 = vld [vmem:[%s0 + $0x38] sm:$0xff]
    %v23 = vld [vmem:[%s0 + $0x40] sm:$0xff]
    %v24 = vld [vmem:[%s0 + $0x48] sm:$0xff]
    %v25 = vld [vmem:[%s0 + $0x50] sm:$0xff]
    %v26 = vld [vmem:[%s0 + $0x58] sm:$0xff]
    %v27 = vld [vmem:[%s0 + $0x60] sm:$0xff]
    %v28 = vld [vmem:[%s0 + $0x68] sm:$0xff]
    %v29 = vld [vmem:[%s0 + $0x70] sm:$0xff]
    %v30 = vld [vmem:[%s0 + $0x78] sm:$0xff]
    %v31 = vld [vmem:[%s0 + $0x80] sm:$0xff]
    %v32 = vld [vmem:[%s0 + $0x88] sm:$0xff]
    %v33 = vld [vmem:[%s0 + $0x90] sm:$0xff]
    %v34 = vld [vmem:[%s0 + $0x98] sm:$0xff]
    %v35 = vld [vmem:[%s1] sm:$0xff]
    %v36 = vld [vmem:[%s2] sm:$0x3]
    %38 = vset.pattern.permute.xlu0 0
    %39 = vperm.xlu0 %38, %v15
    %v40 = vpop.permute.xlu0 %39
    %43 = vset.pattern.permute.xlu0 0
    %44 = vperm.xlu0 %43, %v16
    %v45 = vpop.permute.xlu0 %44
    %48 = vset.pattern.permute.xlu0 0
    %49 = vperm.xlu0 %48, %v17
    %v50 = vpop.permute.xlu0 %49
    %53 = vset.pattern.permute.xlu0 0
    %54 = vperm.xlu0 %53, %v18
    %v55 = vpop.permute.xlu0 %54
    %58 = vset.pattern.permute.xlu0 0
    %59 = vperm.xlu0 %58, %v19
    %v60 = vpop.permute.xlu0 %59
    %63 = vset.pattern.permute.xlu0 0
    %64 = vperm.xlu0 %63, %v20
    %v65 = vpop.permute.xlu0 %64
    %68 = vset.pattern.permute.xlu0 0
    %69 = vperm.xlu0 %68, %v21
    %v70 = vpop.permute.xlu0 %69
    %73 = vset.pattern.permute.xlu0 0
    %74 = vperm.xlu0 %73, %v22
    %v75 = vpop.permute.xlu0 %74
    %78 = vset.pattern.permute.xlu0 0
    %79 = vperm.xlu0 %78, %v23
    %v80 = vpop.permute.xlu0 %79
    %83 = vset.pattern.permute.xlu0 0
    %84 = vperm.xlu0 %83, %v24
    %v85 = vpop.permute.xlu0 %84
    %88 = vset.pattern.permute.xlu0 0
    %89 = vperm.xlu0 %88, %v25
    %v90 = vpop.permute.xlu0 %89
    %93 = vset.pattern.permute.xlu0 0
    %94 = vperm.xlu0 %93, %v26
    %v95 = vpop.permute.xlu0 %94
    %98 = vset.pattern.permute.xlu0 0
    %99 = vperm.xlu0 %98, %v27
    %v100 = vpop.permute.xlu0 %99
    %103 = vset.pattern.permute.xlu0 0
    %104 = vperm.xlu0 %103, %v28
    %v105 = vpop.permute.xlu0 %104
    %108 = vset.pattern.permute.xlu0 0
    %109 = vperm.xlu0 %108, %v29
    %v110 = vpop.permute.xlu0 %109
    %113 = vset.pattern.permute.xlu0 0
    %114 = vperm.xlu0 %113, %v30
    %v115 = vpop.permute.xlu0 %114
    %118 = vset.pattern.permute.xlu0 0
    %119 = vperm.xlu0 %118, %v31
    %v120 = vpop.permute.xlu0 %119
    %123 = vset.pattern.permute.xlu0 0
    %124 = vperm.xlu0 %123, %v32
    %v125 = vpop.permute.xlu0 %124
    %128 = vset.pattern.permute.xlu0 0
    %129 = vperm.xlu0 %128, %v33
    %v130 = vpop.permute.xlu0 %129
    %133 = vset.pattern.permute.xlu0 0
    %134 = vperm.xlu0 %133, %v34
    %v135 = vpop.permute.xlu0 %134
    %v138 = vperm.slane %v35, 0
    %v139 = vperm.slane %v35, 4
    %v142 = vperm.slane %v138, 0
    %v143 = vperm.slane %v139, 0
    %v144 = vmul.f32 %v40, %v142
    %v145 = vmul.f32 %v40, %v143
    %v146 = vmul.f32 %v45, %v142
    %v147 = vmul.f32 %v45, %v143
    %v148 = vmul.f32 %v50, %v142
    %v149 = vmul.f32 %v50, %v143
    %v150 = vmul.f32 %v55, %v142
    %v151 = vmul.f32 %v55, %v143
    %v152 = vmul.f32 %v60, %v142
    %v153 = vmul.f32 %v60, %v143
    %v154 = vmul.f32 %v65, %v142
    %v155 = vmul.f32 %v65, %v143
    %v156 = vmul.f32 %v70, %v142
    %v157 = vmul.f32 %v70, %v143
    %v158 = vmul.f32 %v75, %v142
    %v159 = vmul.f32 %v75, %v143
    %v160 = vmul.f32 %v80, %v142
    %v161 = vmul.f32 %v80, %v143
    %v162 = vmul.f32 %v85, %v142
    %v163 = vmul.f32 %v85, %v143
    %v164 = vmul.f32 %v90, %v142
    %v165 = vmul.f32 %v90, %v143
    %v166 = vmul.f32 %v95, %v142
    %v167 = vmul.f32 %v95, %v143
    %v168 = vmul.f32 %v100, %v142
    %v169 = vmul.f32 %v100, %v143
    %v170 = vmul.f32 %v105, %v142
    %v171 = vmul.f32 %v105, %v143
    %v172 = vmul.f32 %v110, %v142
    %v173 = vmul.f32 %v110, %v143
    %v174 = vmul.f32 %v115, %v142
    %v175 = vmul.f32 %v115, %v143
    %v176 = vmul.f32 %v120, %v142
    %v177 = vmul.f32 %v120, %v143
    %v178 = vmul.f32 %v125, %v142
    %v179 = vmul.f32 %v125, %v143
    %v180 = vmul.f32 %v130, %v142
    %v181 = vmul.f32 %v130, %v143
    %v182 = vmul.f32 %v135, %v142
    %v183 = vmul.f32 %v135, %v143
    %v185 = vperm.slane %v36, 0
    %v186 = vperm.slane %v36, 1
    %v189 = vadd.f32 %v185, %v144
    %v190 = vadd.f32 %v186, %v145
    %v191 = vadd.f32 %v185, %v146
    %v192 = vadd.f32 %v186, %v147
    %v193 = vadd.f32 %v185, %v148
    %v194 = vadd.f32 %v186, %v149
    %v195 = vadd.f32 %v185, %v150
    %v196 = vadd.f32 %v186, %v151
    %v197 = vadd.f32 %v185, %v152
    %v198 = vadd.f32 %v186, %v153
    %v199 = vadd.f32 %v185, %v154
    %v200 = vadd.f32 %v186, %v155
    %v201 = vadd.f32 %v185, %v156
    %v202 = vadd.f32 %v186, %v157
    %v203 = vadd.f32 %v185, %v158
    %v204 = vadd.f32 %v186, %v159
    %v205 = vadd.f32 %v185, %v160
    %v206 = vadd.f32 %v186, %v161
    %v207 = vadd.f32 %v185, %v162
    %v208 = vadd.f32 %v186, %v163
    %v209 = vadd.f32 %v185, %v164
    %v210 = vadd.f32 %v186, %v165
    %v211 = vadd.f32 %v185, %v166
    %v212 = vadd.f32 %v186, %v167
    %v213 = vadd.f32 %v185, %v168
    %v214 = vadd.f32 %v186, %v169
    %v215 = vadd.f32 %v185, %v170
    %v216 = vadd.f32 %v186, %v171
    %v217 = vadd.f32 %v185, %v172
    %v218 = vadd.f32 %v186, %v173
    %v219 = vadd.f32 %v185, %v174
    %v220 = vadd.f32 %v186, %v175
    %v221 = vadd.f32 %v185, %v176
    %v222 = vadd.f32 %v186, %v177
    %v223 = vadd.f32 %v185, %v178
    %v224 = vadd.f32 %v186, %v179
    %v225 = vadd.f32 %v185, %v180
    %v226 = vadd.f32 %v186, %v181
    %v227 = vadd.f32 %v185, %v182
    %v228 = vadd.f32 %v186, %v183
    %229 = vset.pattern.permute.xlu0 1
    %230 = vperm.xlu0 %229, %v15
    %v231 = vpop.permute.xlu0 %230
    %233 = vset.pattern.permute.xlu0 1
    %234 = vperm.xlu0 %233, %v16
    %v235 = vpop.permute.xlu0 %234
    %237 = vset.pattern.permute.xlu0 1
    %238 = vperm.xlu0 %237, %v17
    %v239 = vpop.permute.xlu0 %238
    %241 = vset.pattern.permute.xlu0 1
    %242 = vperm.xlu0 %241, %v18
    %v243 = vpop.permute.xlu0 %242
    %245 = vset.pattern.permute.xlu0 1
    %246 = vperm.xlu0 %245, %v19
    %v247 = vpop.permute.xlu0 %246
    %249 = vset.pattern.permute.xlu0 1
    %250 = vperm.xlu0 %249, %v20
    %v251 = vpop.permute.xlu0 %250
    %253 = vset.pattern.permute.xlu0 1
    %254 = vperm.xlu0 %253, %v21
    %v255 = vpop.permute.xlu0 %254
    %257 = vset.pattern.permute.xlu0 1
    %258 = vperm.xlu0 %257, %v22
    %v259 = vpop.permute.xlu0 %258
    %261 = vset.pattern.permute.xlu0 1
    %262 = vperm.xlu0 %261, %v23
    %v263 = vpop.permute.xlu0 %262
    %265 = vset.pattern.permute.xlu0 1
    %266 = vperm.xlu0 %265, %v24
    %v267 = vpop.permute.xlu0 %266
    %269 = vset.pattern.permute.xlu0 1
    %270 = vperm.xlu0 %269, %v25
    %v271 = vpop.permute.xlu0 %270
    %273 = vset.pattern.permute.xlu0 1
    %274 = vperm.xlu0 %273, %v26
    %v275 = vpop.permute.xlu0 %274
    %277 = vset.pattern.permute.xlu0 1
    %278 = vperm.xlu0 %277, %v27
    %v279 = vpop.permute.xlu0 %278
    %281 = vset.pattern.permute.xlu0 1
    %282 = vperm.xlu0 %281, %v28
    %v283 = vpop.permute.xlu0 %282
    %285 = vset.pattern.permute.xlu0 1
    %286 = vperm.xlu0 %285, %v29
    %v287 = vpop.permute.xlu0 %286
    %289 = vset.pattern.permute.xlu0 1
    %290 = vperm.xlu0 %289, %v30
    %v291 = vpop.permute.xlu0 %290
    %293 = vset.pattern.permute.xlu0 1
    %294 = vperm.xlu0 %293, %v31
    %v295 = vpop.permute.xlu0 %294
    %297 = vset.pattern.permute.xlu0 1
    %298 = vperm.xlu0 %297, %v32
    %v299 = vpop.permute.xlu0 %298
    %301 = vset.pattern.permute.xlu0 1
    %302 = vperm.xlu0 %301, %v33
    %v303 = vpop.permute.xlu0 %302
    %305 = vset.pattern.permute.xlu0 1
    %306 = vperm.xlu0 %305, %v34
    %v307 = vpop.permute.xlu0 %306
    %v309 = vperm.slane %v35, 1
    %v310 = vperm.slane %v35, 5
    %v313 = vperm.slane %v309, 1
    %v314 = vperm.slane %v310, 1
    %v315 = vmul.f32 %v231, %v313
    %v316 = vmul.f32 %v231, %v314
    %v317 = vmul.f32 %v235, %v313
    %v318 = vmul.f32 %v235, %v314
    %v319 = vmul.f32 %v239, %v313
    %v320 = vmul.f32 %v239, %v314
    %v321 = vmul.f32 %v243, %v313
    %v322 = vmul.f32 %v243, %v314
    %v323 = vmul.f32 %v247, %v313
    %v324 = vmul.f32 %v247, %v314
    %v325 = vmul.f32 %v251, %v313
    %v326 = vmul.f32 %v251, %v314
    %v327 = vmul.f32 %v255, %v313
    %v328 = vmul.f32 %v255, %v314
    %v329 = vmul.f32 %v259, %v313
    %v330 = vmul.f32 %v259, %v314
    %v331 = vmul.f32 %v263, %v313
    %v332 = vmul.f32 %v263, %v314
    %v333 = vmul.f32 %v267, %v313
    %v334 = vmul.f32 %v267, %v314
    %v335 = vmul.f32 %v271, %v313
    %v336 = vmul.f32 %v271, %v314
    %v337 = vmul.f32 %v275, %v313
    %v338 = vmul.f32 %v275, %v314
    %v339 = vmul.f32 %v279, %v313
    %v340 = vmul.f32 %v279, %v314
    %v341 = vmul.f32 %v283, %v313
    %v342 = vmul.f32 %v283, %v314
    %v343 = vmul.f32 %v287, %v313
    %v344 = vmul.f32 %v287, %v314
    %v345 = vmul.f32 %v291, %v313
    %v346 = vmul.f32 %v291, %v314
    %v347 = vmul.f32 %v295, %v313
    %v348 = vmul.f32 %v295, %v314
    %v349 = vmul.f32 %v299, %v313
    %v350 = vmul.f32 %v299, %v314
    %v351 = vmul.f32 %v303, %v313
    %v352 = vmul.f32 %v303, %v314
    %v353 = vmul.f32 %v307, %v313
    %v354 = vmul.f32 %v307, %v314
    %v355 = vadd.f32 %v189, %v315
    %v356 = vadd.f32 %v190, %v316
    %v357 = vadd.f32 %v191, %v317
    %v358 = vadd.f32 %v192, %v318
    %v359 = vadd.f32 %v193, %v319
    %v360 = vadd.f32 %v194, %v320
    %v361 = vadd.f32 %v195, %v321
    %v362 = vadd.f32 %v196, %v322
    %v363 = vadd.f32 %v197, %v323
    %v364 = vadd.f32 %v198, %v324
    %v365 = vadd.f32 %v199, %v325
    %v366 = vadd.f32 %v200, %v326
    %v367 = vadd.f32 %v201, %v327
    %v368 = vadd.f32 %v202, %v328
    %v369 = vadd.f32 %v203, %v329
    %v370 = vadd.f32 %v204, %v330
    %v371 = vadd.f32 %v205, %v331
    %v372 = vadd.f32 %v206, %v332
    %v373 = vadd.f32 %v207, %v333
    %v374 = vadd.f32 %v208, %v334
    %v375 = vadd.f32 %v209, %v335
    %v376 = vadd.f32 %v210, %v336
    %v377 = vadd.f32 %v211, %v337
    %v378 = vadd.f32 %v212, %v338
    %v379 = vadd.f32 %v213, %v339
    %v380 = vadd.f32 %v214, %v340
    %v381 = vadd.f32 %v215, %v341
    %v382 = vadd.f32 %v216, %v342
    %v383 = vadd.f32 %v217, %v343
    %v384 = vadd.f32 %v218, %v344
    %v385 = vadd.f32 %v219, %v345
    %v386 = vadd.f32 %v220, %v346
    %v387 = vadd.f32 %v221, %v347
    %v388 = vadd.f32 %v222, %v348
    %v389 = vadd.f32 %v223, %v349
    %v390 = vadd.f32 %v224, %v350
    %v391 = vadd.f32 %v225, %v351
    %v392 = vadd.f32 %v226, %v352
    %v393 = vadd.f32 %v227, %v353
    %v394 = vadd.f32 %v228, %v354
    %395 = vset.pattern.permute.xlu0 2
    %396 = vperm.xlu0 %395, %v15
    %v397 = vpop.permute.xlu0 %396
    %399 = vset.pattern.permute.xlu0 2
    %400 = vperm.xlu0 %399, %v16
    %v401 = vpop.permute.xlu0 %400
    %403 = vset.pattern.permute.xlu0 2
    %404 = vperm.xlu0 %403, %v17
    %v405 = vpop.permute.xlu0 %404
    %407 = vset.pattern.permute.xlu0 2
    %408 = vperm.xlu0 %407, %v18
    %v409 = vpop.permute.xlu0 %408
    %411 = vset.pattern.permute.xlu0 2
    %412 = vperm.xlu0 %411, %v19
    %v413 = vpop.permute.xlu0 %412
    %415 = vset.pattern.permute.xlu0 2
    %416 = vperm.xlu0 %415, %v20
    %v417 = vpop.permute.xlu0 %416
    %419 = vset.pattern.permute.xlu0 2
    %420 = vperm.xlu0 %419, %v21
    %v421 = vpop.permute.xlu0 %420
    %423 = vset.pattern.permute.xlu0 2
    %424 = vperm.xlu0 %423, %v22
    %v425 = vpop.permute.xlu0 %424
    %427 = vset.pattern.permute.xlu0 2
    %428 = vperm.xlu0 %427, %v23
    %v429 = vpop.permute.xlu0 %428
    %431 = vset.pattern.permute.xlu0 2
    %432 = vperm.xlu0 %431, %v24
    %v433 = vpop.permute.xlu0 %432
    %435 = vset.pattern.permute.xlu0 2
    %436 = vperm.xlu0 %435, %v25
    %v437 = vpop.permute.xlu0 %436
    %439 = vset.pattern.permute.xlu0 2
    %440 = vperm.xlu0 %439, %v26
    %v441 = vpop.permute.xlu0 %440
    %443 = vset.pattern.permute.xlu0 2
    %444 = vperm.xlu0 %443, %v27
    %v445 = vpop.permute.xlu0 %444
    %447 = vset.pattern.permute.xlu0 2
    %448 = vperm.xlu0 %447, %v28
    %v449 = vpop.permute.xlu0 %448
    %451 = vset.pattern.permute.xlu0 2
    %452 = vperm.xlu0 %451, %v29
    %v453 = vpop.permute.xlu0 %452
    %455 = vset.pattern.permute.xlu0 2
    %456 = vperm.xlu0 %455, %v30
    %v457 = vpop.permute.xlu0 %456
    %459 = vset.pattern.permute.xlu0 2
    %460 = vperm.xlu0 %459, %v31
    %v461 = vpop.permute.xlu0 %460
    %463 = vset.pattern.permute.xlu0 2
    %464 = vperm.xlu0 %463, %v32
    %v465 = vpop.permute.xlu0 %464
    %467 = vset.pattern.permute.xlu0 2
    %468 = vperm.xlu0 %467, %v33
    %v469 = vpop.permute.xlu0 %468
    %471 = vset.pattern.permute.xlu0 2
    %472 = vperm.xlu0 %471, %v34
    %v473 = vpop.permute.xlu0 %472
    %v475 = vperm.slane %v35, 2
    %v476 = vperm.slane %v35, 6
    %v479 = vperm.slane %v475, 2
    %v480 = vperm.slane %v476, 2
    %v481 = vmul.f32 %v397, %v479
    %v482 = vmul.f32 %v397, %v480
    %v483 = vmul.f32 %v401, %v479
    %v484 = vmul.f32 %v401, %v480
    %v485 = vmul.f32 %v405, %v479
    %v486 = vmul.f32 %v405, %v480
    %v487 = vmul.f32 %v409, %v479
    %v488 = vmul.f32 %v409, %v480
    %v489 = vmul.f32 %v413, %v479
    %v490 = vmul.f32 %v413, %v480
    %v491 = vmul.f32 %v417, %v479
    %v492 = vmul.f32 %v417, %v480
    %v493 = vmul.f32 %v421, %v479
    %v494 = vmul.f32 %v421, %v480
    %v495 = vmul.f32 %v425, %v479
    %v496 = vmul.f32 %v425, %v480
    %v497 = vmul.f32 %v429, %v479
    %v498 = vmul.f32 %v429, %v480
    %v499 = vmul.f32 %v433, %v479
    %v500 = vmul.f32 %v433, %v480
    %v501 = vmul.f32 %v437, %v479
    %v502 = vmul.f32 %v437, %v480
    %v503 = vmul.f32 %v441, %v479
    %v504 = vmul.f32 %v441, %v480
    %v505 = vmul.f32 %v445, %v479
    %v506 = vmul.f32 %v445, %v480
    %v507 = vmul.f32 %v449, %v479
    %v508 = vmul.f32 %v449, %v480
    %v509 = vmul.f32 %v453, %v479
    %v510 = vmul.f32 %v453, %v480
    %v511 = vmul.f32 %v457, %v479
    %v512 = vmul.f32 %v457, %v480
    %v513 = vmul.f32 %v461, %v479
    %v514 = vmul.f32 %v461, %v480
    %v515 = vmul.f32 %v465, %v479
    %v516 = vmul.f32 %v465, %v480
    %v517 = vmul.f32 %v469, %v479
    %v518 = vmul.f32 %v469, %v480
    %v519 = vmul.f32 %v473, %v479
    %v520 = vmul.f32 %v473, %v480
    %v521 = vadd.f32 %v355, %v481
    %v522 = vadd.f32 %v356, %v482
    %v523 = vadd.f32 %v357, %v483
    %v524 = vadd.f32 %v358, %v484
    %v525 = vadd.f32 %v359, %v485
    %v526 = vadd.f32 %v360, %v486
    %v527 = vadd.f32 %v361, %v487
    %v528 = vadd.f32 %v362, %v488
    %v529 = vadd.f32 %v363, %v489
    %v530 = vadd.f32 %v364, %v490
    %v531 = vadd.f32 %v365, %v491
    %v532 = vadd.f32 %v366, %v492
    %v533 = vadd.f32 %v367, %v493
    %v534 = vadd.f32 %v368, %v494
    %v535 = vadd.f32 %v369, %v495
    %v536 = vadd.f32 %v370, %v496
    %v537 = vadd.f32 %v371, %v497
    %v538 = vadd.f32 %v372, %v498
    %v539 = vadd.f32 %v373, %v499
    %v540 = vadd.f32 %v374, %v500
    %v541 = vadd.f32 %v375, %v501
    %v542 = vadd.f32 %v376, %v502
    %v543 = vadd.f32 %v377, %v503
    %v544 = vadd.f32 %v378, %v504
    %v545 = vadd.f32 %v379, %v505
    %v546 = vadd.f32 %v380, %v506
    %v547 = vadd.f32 %v381, %v507
    %v548 = vadd.f32 %v382, %v508
    %v549 = vadd.f32 %v383, %v509
    %v550 = vadd.f32 %v384, %v510
    %v551 = vadd.f32 %v385, %v511
    %v552 = vadd.f32 %v386, %v512
    %v553 = vadd.f32 %v387, %v513
    %v554 = vadd.f32 %v388, %v514
    %v555 = vadd.f32 %v389, %v515
    %v556 = vadd.f32 %v390, %v516
    %v557 = vadd.f32 %v391, %v517
    %v558 = vadd.f32 %v392, %v518
    %v559 = vadd.f32 %v393, %v519
    %v560 = vadd.f32 %v394, %v520
    %561 = vset.pattern.permute.xlu0 3
    %562 = vperm.xlu0 %561, %v15
    %v563 = vpop.permute.xlu0 %562
    %565 = vset.pattern.permute.xlu0 3
    %566 = vperm.xlu0 %565, %v16
    %v567 = vpop.permute.xlu0 %566
    %569 = vset.pattern.permute.xlu0 3
    %570 = vperm.xlu0 %569, %v17
    %v571 = vpop.permute.xlu0 %570
    %573 = vset.pattern.permute.xlu0 3
    %574 = vperm.xlu0 %573, %v18
    %v575 = vpop.permute.xlu0 %574
    %577 = vset.pattern.permute.xlu0 3
    %578 = vperm.xlu0 %577, %v19
    %v579 = vpop.permute.xlu0 %578
    %581 = vset.pattern.permute.xlu0 3
    %582 = vperm.xlu0 %581, %v20
    %v583 = vpop.permute.xlu0 %582
    %585 = vset.pattern.permute.xlu0 3
    %586 = vperm.xlu0 %585, %v21
    %v587 = vpop.permute.xlu0 %586
    %589 = vset.pattern.permute.xlu0 3
    %590 = vperm.xlu0 %589, %v22
    %v591 = vpop.permute.xlu0 %590
    %593 = vset.pattern.permute.xlu0 3
    %594 = vperm.xlu0 %593, %v23
    %v595 = vpop.permute.xlu0 %594
    %597 = vset.pattern.permute.xlu0 3
    %598 = vperm.xlu0 %597, %v24
    %v599 = vpop.permute.xlu0 %598
    %601 = vset.pattern.permute.xlu0 3
    %602 = vperm.xlu0 %601, %v25
    %v603 = vpop.permute.xlu0 %602
    %605 = vset.pattern.permute.xlu0 3
    %606 = vperm.xlu0 %605, %v26
    %v607 = vpop.permute.xlu0 %606
    %609 = vset.pattern.permute.xlu0 3
    %610 = vperm.xlu0 %609, %v27
    %v611 = vpop.permute.xlu0 %610
    %613 = vset.pattern.permute.xlu0 3
    %614 = vperm.xlu0 %613, %v28
    %v615 = vpop.permute.xlu0 %614
    %617 = vset.pattern.permute.xlu0 3
    %618 = vperm.xlu0 %617, %v29
    %v619 = vpop.permute.xlu0 %618
    %621 = vset.pattern.permute.xlu0 3
    %622 = vperm.xlu0 %621, %v30
    %v623 = vpop.permute.xlu0 %622
    %625 = vset.pattern.permute.xlu0 3
    %626 = vperm.xlu0 %625, %v31
    %v627 = vpop.permute.xlu0 %626
    %629 = vset.pattern.permute.xlu0 3
    %630 = vperm.xlu0 %629, %v32
    %v631 = vpop.permute.xlu0 %630
    %633 = vset.pattern.permute.xlu0 3
    %634 = vperm.xlu0 %633, %v33
    %v635 = vpop.permute.xlu0 %634
    %637 = vset.pattern.permute.xlu0 3
    %638 = vperm.xlu0 %637, %v34
    %v639 = vpop.permute.xlu0 %638
    %v641 = vperm.slane %v35, 3
    %v642 = vperm.slane %v35, 7
    %v645 = vperm.slane %v641, 3
    %v646 = vperm.slane %v642, 3
    %v647 = vmul.f32 %v563, %v645
    %v648 = vmul.f32 %v563, %v646
    %v649 = vmul.f32 %v567, %v645
    %v650 = vmul.f32 %v567, %v646
    %v651 = vmul.f32 %v571, %v645
    %v652 = vmul.f32 %v571, %v646
    %v653 = vmul.f32 %v575, %v645
    %v654 = vmul.f32 %v575, %v646
    %v655 = vmul.f32 %v579, %v645
    %v656 = vmul.f32 %v579, %v646
    %v657 = vmul.f32 %v583, %v645
    %v658 = vmul.f32 %v583, %v646
    %v659 = vmul.f32 %v587, %v645
    %v660 = vmul.f32 %v587, %v646
    %v661 = vmul.f32 %v591, %v645
    %v662 = vmul.f32 %v591, %v646
    %v663 = vmul.f32 %v595, %v645
    %v664 = vmul.f32 %v595, %v646
    %v665 = vmul.f32 %v599, %v645
    %v666 = vmul.f32 %v599, %v646
    %v667 = vmul.f32 %v603, %v645
    %v668 = vmul.f32 %v603, %v646
    %v669 = vmul.f32 %v607, %v645
    %v670 = vmul.f32 %v607, %v646
    %v671 = vmul.f32 %v611, %v645
    %v672 = vmul.f32 %v611, %v646
    %v673 = vmul.f32 %v615, %v645
    %v674 = vmul.f32 %v615, %v646
    %v675 = vmul.f32 %v619, %v645
    %v676 = vmul.f32 %v619, %v646
    %v677 = vmul.f32 %v623, %v645
    %v678 = vmul.f32 %v623, %v646
    %v679 = vmul.f32 %v627, %v645
    %v680 = vmul.f32 %v627, %v646
    %v681 = vmul.f32 %v631, %v645
    %v682 = vmul.f32 %v631, %v646
    %v683 = vmul.f32 %v635, %v645
    %v684 = vmul.f32 %v635, %v646
    %v685 = vmul.f32 %v639, %v645
    %v686 = vmul.f32 %v639, %v646
    %v687 = vadd.f32 %v521, %v647
    %v688 = vadd.f32 %v522, %v648
    %v689 = vadd.f32 %v523, %v649
    %v690 = vadd.f32 %v524, %v650
    %v691 = vadd.f32 %v525, %v651
    %v692 = vadd.f32 %v526, %v652
    %v693 = vadd.f32 %v527, %v653
    %v694 = vadd.f32 %v528, %v654
    %v695 = vadd.f32 %v529, %v655
    %v696 = vadd.f32 %v530, %v656
    %v697 = vadd.f32 %v531, %v657
    %v698 = vadd.f32 %v532, %v658
    %v699 = vadd.f32 %v533, %v659
    %v700 = vadd.f32 %v534, %v660
    %v701 = vadd.f32 %v535, %v661
    %v702 = vadd.f32 %v536, %v662
    %v703 = vadd.f32 %v537, %v663
    %v704 = vadd.f32 %v538, %v664
    %v705 = vadd.f32 %v539, %v665
    %v706 = vadd.f32 %v540, %v666
    %v707 = vadd.f32 %v541, %v667
    %v708 = vadd.f32 %v542, %v668
    %v709 = vadd.f32 %v543, %v669
    %v710 = vadd.f32 %v544, %v670
    %v711 = vadd.f32 %v545, %v671
    %v712 = vadd.f32 %v546, %v672
    %v713 = vadd.f32 %v547, %v673
    %v714 = vadd.f32 %v548, %v674
    %v715 = vadd.f32 %v549, %v675
    %v716 = vadd.f32 %v550, %v676
    %v717 = vadd.f32 %v551, %v677
    %v718 = vadd.f32 %v552, %v678
    %v719 = vadd.f32 %v553, %v679
    %v720 = vadd.f32 %v554, %v680
    %v721 = vadd.f32 %v555, %v681
    %v722 = vadd.f32 %v556, %v682
    %v723 = vadd.f32 %v557, %v683
    %v724 = vadd.f32 %v558, %v684
    %v725 = vadd.f32 %v559, %v685
    %v726 = vadd.f32 %v560, %v686
    %727 = vst [vmem:[#allocation2] sm:$0xff] %v687
    %vm728 = vcmask 523264
    %729 = vst.msk [vmem:[#allocation2 + $0x8] sm:$0xff] %vm728, %v688
    %730 = vst [vmem:[#allocation2 + $0x10] sm:$0xff] %v689
    %731 = vst.msk [vmem:[#allocation2 + $0x18] sm:$0xff] %vm728, %v690
    %732 = vst [vmem:[#allocation2 + $0x20] sm:$0xff] %v691
    %733 = vst.msk [vmem:[#allocation2 + $0x28] sm:$0xff] %vm728, %v692
    %734 = vst [vmem:[#allocation2 + $0x30] sm:$0xff] %v693
    %735 = vst.msk [vmem:[#allocation2 + $0x38] sm:$0xff] %vm728, %v694
    %736 = vst [vmem:[#allocation2 + $0x40] sm:$0xff] %v695
    %737 = vst.msk [vmem:[#allocation2 + $0x48] sm:$0xff] %vm728, %v696
    %738 = vst [vmem:[#allocation2 + $0x50] sm:$0xff] %v697
    %739 = vst.msk [vmem:[#allocation2 + $0x58] sm:$0xff] %vm728, %v698
    %740 = vst [vmem:[#allocation2 + $0x60] sm:$0xff] %v699
    %741 = vst.msk [vmem:[#allocation2 + $0x68] sm:$0xff] %vm728, %v700
    %742 = vst [vmem:[#allocation2 + $0x70] sm:$0xff] %v701
    %743 = vst.msk [vmem:[#allocation2 + $0x78] sm:$0xff] %vm728, %v702
    %744 = vst [vmem:[#allocation2 + $0x80] sm:$0xff] %v703
    %745 = vst.msk [vmem:[#allocation2 + $0x88] sm:$0xff] %vm728, %v704
    %746 = vst [vmem:[#allocation2 + $0x90] sm:$0xff] %v705
    %747 = vst.msk [vmem:[#allocation2 + $0x98] sm:$0xff] %vm728, %v706
    %748 = vst [vmem:[#allocation2 + $0xa0] sm:$0xff] %v707
    %749 = vst.msk [vmem:[#allocation2 + $0xa8] sm:$0xff] %vm728, %v708
    %750 = vst [vmem:[#allocation2 + $0xb0] sm:$0xff] %v709
    %751 = vst.msk [vmem:[#allocation2 + $0xb8] sm:$0xff] %vm728, %v710
    %752 = vst [vmem:[#allocation2 + $0xc0] sm:$0xff] %v711
    %753 = vst.msk [vmem:[#allocation2 + $0xc8] sm:$0xff] %vm728, %v712
    %754 = vst [vmem:[#allocation2 + $0xd0] sm:$0xff] %v713
    %755 = vst.msk [vmem:[#allocation2 + $0xd8] sm:$0xff] %vm728, %v714
    %756 = vst [vmem:[#allocation2 + $0xe0] sm:$0xff] %v715
    %757 = vst.msk [vmem:[#allocation2 + $0xe8] sm:$0xff] %vm728, %v716
    %758 = vst [vmem:[#allocation2 + $0xf0] sm:$0xff] %v717
    %759 = vst.msk [vmem:[#allocation2 + $0xf8] sm:$0xff] %vm728, %v718
    %760 = vst [vmem:[#allocation2 + $0x100] sm:$0xff] %v719
    %761 = vst.msk [vmem:[#allocation2 + $0x108] sm:$0xff] %vm728, %v720
    %762 = vst [vmem:[#allocation2 + $0x110] sm:$0xff] %v721
    %763 = vst.msk [vmem:[#allocation2 + $0x118] sm:$0xff] %vm728, %v722
    %764 = vst [vmem:[#allocation2 + $0x120] sm:$0xff] %v723
    %765 = vst.msk [vmem:[#allocation2 + $0x128] sm:$0xff] %vm728, %v724
    %766 = vst [vmem:[#allocation2 + $0x130] sm:$0xff] %v725
    %767 = vst.msk [vmem:[#allocation2 + $0x138] sm:$0xff] %vm728, %v726
    // Predicated region
    $region14: #{patch_embed_forward.1} parent=1 // pred_check
      _
    $region15: #{patch_embed_forward.1} parent=1 // pred_check_branch
      %769 = sbr.rel (0) target = $region17
    $region16: #{patch_embed_forward.1} parent=1 // pred_region
      %771 = vsyncadd [#allocation3], 0
      %s772 = sshll.u32 [#allocation2], 4
      %s773 = int_to_ptr.vmem [resolvable:$true] %s772
      %s774 = sshll.u32 %s3, 4
      %s775 = int_to_ptr.hbm [resolvable:$true] %s774
      %780 = dma.vmem_to_hbm [thread:$0]  %s773, 5120, %s775, [#allocation3], 256, 256, 16
    $region17: #{patch_embed_forward.1} parent=1 // pred_fallthru
      _
    // Predicated region
    $region18: #{patch_embed_forward.1} parent=1 // pred_check
      _
    $region19: #{patch_embed_forward.1} parent=1 // pred_check_branch
      %782 = sbr.rel (0) target = $region21
    $region20: #{patch_embed_forward.1} parent=1 // pred_region
      %784 = dma.done [#allocation3], 5120
    $region21: #{patch_embed_forward.1} parent=1 // pred_fallthru
      _
    %785 = vsyncpa [#allocation3], 1

</llo_original>
